<compile_context>
chip_gen: v7x
topology: tpu7x:2x2x1
jax: 0.10.0
libtpu: 0.0.40
codegen_flags: <defaults>
</compile_context>

<pallas_src>
import math

import jax
import jax.numpy as jnp
from jax.experimental import pallas as pl
from jax.experimental.pallas import tpu as pltpu


# ---------------------------------------------------------------------------
# Kernels: pure VPU elementwise multiply; casts / lane broadcasts are free.
# ---------------------------------------------------------------------------

def _mul_kernel(x_ref, m_ref, o_ref):
    o_ref[...] = x_ref[...].astype(o_ref.dtype) * m_ref[...].astype(o_ref.dtype)


def _mul_scalar_kernel(s_ref, x_ref, o_ref):
    # Scalar mask lives in SMEM: no HBM stream / no VMEM double-buffer for it.
    o_ref[...] = x_ref[...].astype(o_ref.dtype) * s_ref[0].astype(o_ref.dtype)


# ---------------------------------------------------------------------------
# Tiling helpers.
# ---------------------------------------------------------------------------

_LANE_CANDIDATES = (8192, 4096, 2048, 1024, 512, 256, 128)


def _lane_dense_view(total):
    """Pick (rows, cols) with cols a large multiple of 128 dividing `total`."""
    for cols in _LANE_CANDIDATES:
        if total % cols == 0:
            return total // cols, cols
    return None


def _dense_2d(total, out_shape):
    view = _lane_dense_view(total)
    if view is not None:
        return view
    # Rare: no 128-divisor.  Merge everything but the last (full-extent) dim.
    cols = out_shape[-1]
    return total // cols, cols


def _sublane_quantum(*dtypes):
    """Sublane rounding: 8 for 32-bit, 16 for 16-bit, 32 for 8-bit dtypes."""
    min_item = min(int(jnp.dtype(d).itemsize) for d in dtypes)
    return max(8, 32 // max(1, min_item))


def _chip_budget():
    """(per-grid-step byte budget across all streams, vmem_limit_bytes)."""
    kind = ""
    try:
        kind = jax.devices()[0].device_kind.lower()
    except Exception:
        pass
    if "v7" in kind or "7x" in kind:
        # 3.2 TB/s HBM: big tiles amortize the ~0.35us/step overhead, but
        # physical VMEM is only 64 MiB -> ~32 MiB double-buffered working set.
        return 16 << 20, 48 << 20
    if "v5 lite" in kind or "v5e" in kind or "v5lite" in kind:
        # Default scoped VMEM is 16 MiB on v5e; ~2 MiB/stream is near-roofline.
        return 6 << 20, 24 << 20
    # v6e / default: ~4 MiB per stream; 2x-buffered ~= 24 MiB.
    return 12 << 20, 40 << 20


def _row_tile(rows, bytes_per_row, quantum, budget_bytes):
    """Rows per block: fit the per-step byte budget, stay sublane-aligned,
    and keep the grid >= 2 steps so v7x's two TensorCores both get work."""
    tm = max(1, budget_bytes // max(1, bytes_per_row))
    if rows >= 2 * quantum:
        half = -(-rows // 2)                       # ceil(rows / 2)
        half = -(-half // quantum) * quantum       # round up to quantum
        tm = min(tm, half)
    if tm >= rows:
        return rows
    if tm <= quantum:
        return min(rows, quantum)
    return (tm // quantum) * quantum


# ---------------------------------------------------------------------------
# pallas_call drivers.
# ---------------------------------------------------------------------------

def _tiled_mul(x2, m2, out_dtype):
    """x2: (rows, cols); m2: (rows, cols) or (rows, 1).  Row-tiled pipeline."""
    rows, cols = x2.shape
    m_cols = m2.shape[1]
    out_item = jnp.dtype(out_dtype).itemsize
    bytes_per_row = cols * (x2.dtype.itemsize + out_item) + m_cols * m2.dtype.itemsize
    budget, vmem_limit = _chip_budget()
    quantum = _sublane_quantum(x2.dtype, m2.dtype, out_dtype)
    tm = _row_tile(rows, bytes_per_row, quantum, budget)
    return pl.pallas_call(
        _mul_kernel,
        out_shape=jax.ShapeDtypeStruct((rows, cols), out_dtype),
        grid=(pl.cdiv(rows, tm),),
        in_specs=[
            pl.BlockSpec((tm, cols), lambda i: (i, 0)),
            pl.BlockSpec((tm, m_cols), lambda i: (i, 0)),
        ],
        out_specs=pl.BlockSpec((tm, cols), lambda i: (i, 0)),
        compiler_params=pltpu.CompilerParams(
            dimension_semantics=("parallel",),
            vmem_limit_bytes=vmem_limit),
        cost_estimate=pl.CostEstimate(
            flops=int(rows) * int(cols), transcendentals=0,
            bytes_accessed=int(rows * bytes_per_row)),
    )(x2, m2)


def _tiled_mul_scalar(x2, scalar, out_dtype):
    """x2: (rows, cols); scalar: shape-(1,) 32-bit value passed via SMEM."""
    rows, cols = x2.shape
    out_item = jnp.dtype(out_dtype).itemsize
    bytes_per_row = cols * (x2.dtype.itemsize + out_item)
    budget, vmem_limit = _chip_budget()
    quantum = _sublane_quantum(x2.dtype, out_dtype)
    tm = _row_tile(rows, bytes_per_row, quantum, budget)
    return pl.pallas_call(
        _mul_scalar_kernel,
        out_shape=jax.ShapeDtypeStruct((rows, cols), out_dtype),
        grid=(pl.cdiv(rows, tm),),
        in_specs=[
            pl.BlockSpec(memory_space=pltpu.MemorySpace.SMEM),
            pl.BlockSpec((tm, cols), lambda i: (i, 0)),
        ],
        out_specs=pl.BlockSpec((tm, cols), lambda i: (i, 0)),
        compiler_params=pltpu.CompilerParams(
            dimension_semantics=("parallel",),
            vmem_limit_bytes=vmem_limit),
        cost_estimate=pl.CostEstimate(
            flops=int(rows) * int(cols), transcendentals=0,
            bytes_accessed=int(rows * bytes_per_row)),
    )(scalar, x2)


def _grouped_mul(x4, m3, out_dtype):
    """x4: (A, B, cr, cols); m3: (A, cr, cols).  The mask is constant over the
    B axis: the mask BlockSpec index_map simply ignores it, so the broadcast
    is never materialized in HBM.  B is the innermost grid axis so the mask's
    block index is unchanged across it and its DMA is not re-issued."""
    A, B, cr, cols = x4.shape
    out_item = jnp.dtype(out_dtype).itemsize
    bytes_per_row = cols * (x4.dtype.itemsize + out_item + m3.dtype.itemsize)
    budget, vmem_limit = _chip_budget()
    quantum = _sublane_quantum(x4.dtype, m3.dtype, out_dtype)
    tm = _row_tile(cr, bytes_per_row, quantum, budget)
    bytes_accessed = int(A * B * cr * cols * (x4.dtype.itemsize + out_item)
                         + A * cr * cols * m3.dtype.itemsize)
    return pl.pallas_call(
        _mul_kernel,
        out_shape=jax.ShapeDtypeStruct((A, B, cr, cols), out_dtype),
        grid=(A, pl.cdiv(cr, tm), B),
        in_specs=[
            pl.BlockSpec((1, 1, tm, cols), lambda a, t, b: (a, b, t, 0)),
            pl.BlockSpec((1, tm, cols), lambda a, t, b: (a, t, 0)),
        ],
        out_specs=pl.BlockSpec((1, 1, tm, cols), lambda a, t, b: (a, b, t, 0)),
        compiler_params=pltpu.CompilerParams(
            dimension_semantics=("parallel", "parallel", "parallel"),
            vmem_limit_bytes=vmem_limit),
        cost_estimate=pl.CostEstimate(
            flops=int(A * B * cr) * int(cols), transcendentals=0,
            bytes_accessed=bytes_accessed),
    )(x4, m3)


# ---------------------------------------------------------------------------
# Public wrapper: torch.mul(x, mask) with numpy-style broadcasting.
# ---------------------------------------------------------------------------

def mask_layer(x, mask):
    x = jnp.asarray(x)
    mask = jnp.asarray(mask)
    # NOTE: JAX/NumPy promotion; can differ from torch for exotic int/float
    # mixes, but matches it for the float/bool masks MaskLayer is used with.
    out_dtype = jnp.result_type(x.dtype, mask.dtype)
    out_shape = tuple(jnp.broadcast_shapes(x.shape, mask.shape))
    nd = len(out_shape)
    total = int(math.prod(out_shape)) if nd else 1

    if nd == 0 or total == 0 or out_dtype == jnp.bool_:
        return jnp.multiply(x, mask)            # degenerate: nothing to tile

    # Multiplication is commutative: stream whichever operand is full-shape,
    # broadcast the narrow one inside the kernel.
    if x.shape == out_shape:
        full, narrow = x, mask
    elif mask.shape == out_shape:
        full, narrow = mask, x
    else:
        # Both operands broadcast (rare): materialize x, keep mask narrow.
        full, narrow = jnp.broadcast_to(x, out_shape), mask

    # Keep narrow dtypes narrow in HBM; bool is awkward in VMEM -> int8.
    if full.dtype == jnp.bool_:
        full = full.astype(jnp.int8)
    if narrow.dtype == jnp.bool_:
        narrow = narrow.astype(jnp.int8)

    ne = (1,) * (nd - narrow.ndim) + tuple(narrow.shape)
    narrow = narrow.reshape(ne)

    # ---- Case 0: scalar narrow operand -> SMEM scalar (no HBM stream). -----
    if narrow.size == 1:
        rows, cols = _dense_2d(total, out_shape)
        s = narrow.reshape((1,)).astype(out_dtype)
        s = s.astype(jnp.float32 if jnp.issubdtype(out_dtype, jnp.floating)
                     else jnp.int32)            # SMEM holds 32-bit scalars
        out2 = _tiled_mul_scalar(full.reshape(rows, cols), s, out_dtype)
        return out2.reshape(out_shape)

    # ---- Case 1: narrow already elementwise-matches the output. ------------
    if ne == out_shape:
        rows, cols = _dense_2d(total, out_shape)
        out2 = _tiled_mul(full.reshape(rows, cols),
                          narrow.reshape(rows, cols), out_dtype)
        return out2.reshape(out_shape)

    # ---- Case 2: narrow constant over a trailing suffix (per-channel etc). -
    suffix = 0
    for d in reversed(range(nd)):
        if ne[d] != 1:
            break
        suffix += 1
    if suffix > 0:
        cols = int(math.prod(out_shape[nd - suffix:]))
        if cols % 128 == 0:                     # lane-dense output only
            rows = total // cols
            prefix_out = out_shape[:nd - suffix]
            # Only `rows` scalars materialized -> negligible HBM traffic.
            col = jnp.broadcast_to(narrow.reshape(ne[:nd - suffix]),
                                   prefix_out).reshape(rows, 1)
            out2 = _tiled_mul(full.reshape(rows, cols), col, out_dtype)
            return out2.reshape(out_shape)
        # else: narrow lanes would force masked partial stores -> fall through.

    # ---- Case 3: one contiguous broadcast run with a lane-dense trailing ---
    # ---- match: grid index_map ignores the broadcast axis (no HBM copy). ---
    bcast = [d for d in range(nd) if ne[d] != out_shape[d]]
    if bcast:
        s0, e0 = bcast[0], bcast[-1]
        contiguous = (e0 - s0 + 1) == len(bcast)
        trailing_match = all(ne[d] == out_shape[d] for d in range(e0 + 1, nd))
        if contiguous and trailing_match:
            A = int(math.prod(out_shape[:s0])) if s0 > 0 else 1
            B = int(math.prod(out_shape[s0:e0 + 1]))
            C = int(math.prod(out_shape[e0 + 1:])) if e0 + 1 < nd else 1
            view = _lane_dense_view(C)
            if view is not None:
                cr, cols = view
                out4 = _grouped_mul(full.reshape(A, B, cr, cols),
                                    narrow.reshape(A, cr, cols), out_dtype)
                return out4.reshape(out_shape)

    # ---- Fallback: broadcast pattern interleaves awkwardly with the lane ---
    # ---- axis (rare).  Materialize the narrow operand, go lane-dense. ------
    # TODO(synk): multi-run broadcast masks could use a higher-rank grid with
    # per-axis index_maps instead of this materialization.
    full_n = jnp.broadcast_to(narrow, out_shape)
    rows, cols = _dense_2d(total, out_shape)
    out2 = _tiled_mul(full.reshape(rows, cols), full_n.reshape(rows, cols),
                      out_dtype)
    return out2.reshape(out_shape)


if __name__ == "__main__":
    key = jax.random.PRNGKey(0)
    kx, km = jax.random.split(key)

    x = jax.random.normal(kx, (2, 4, 16, 16), dtype=jnp.float32)

    # Same-shape mask (Case 1: elementwise stream).
    mask = (jax.random.uniform(km, (2, 4, 16, 16)) > 0.5).astype(jnp.float32)
    out = mask_layer(x, mask)
    jax.block_until_ready(out)
    ref = x * mask
    assert out.shape == ref.shape and out.dtype == ref.dtype
    assert jnp.allclose(out, ref), "mismatch vs reference (elementwise)"

    # Per-channel mask (Case 2: trailing-constant column).
    cmask = (jax.random.uniform(km, (1, 4, 1, 1)) > 0.5).astype(jnp.float32)
    out_c = mask_layer(x, cmask)
    jax.block_until_ready(out_c)
    assert jnp.allclose(out_c, x * cmask), "mismatch vs reference (per-channel)"

    # Scalar mask (Case 0: SMEM scalar).
    out_s = mask_layer(x, jnp.float32(0.5))
    jax.block_until_ready(out_s)
    assert jnp.allclose(out_s, x * jnp.float32(0.5)), "mismatch vs reference (scalar)"

    # Middle-broadcast mask (Case 3: index_map-based broadcast, no HBM copy).
    bmask = (jax.random.uniform(km, (2, 1, 16, 16)) > 0.5).astype(jnp.float32)
    out_b = mask_layer(x, bmask)
    jax.block_until_ready(out_b)
    assert jnp.allclose(out_b, x * bmask), "mismatch vs reference (broadcast mask)"

    # x is the broadcast operand (role swap).
    xs = jax.random.normal(kx, (4, 16, 16), dtype=jnp.float32)
    fm = (jax.random.uniform(km, (2, 4, 16, 16)) > 0.5).astype(jnp.float32)
    out_w = mask_layer(xs, fm)
    jax.block_until_ready(out_w)
    assert jnp.allclose(out_w, xs * fm), "mismatch vs reference (broadcast x)"

    print("KERNEL_OK")
</pallas_src>

<mosaic_0001>
module attributes {stable_mosaic.version = 11 : i64} {
  func.func @_mul_kernel(%arg0: i32, %arg1: memref<1x2048xf32, #tpu.memory_space<vmem>>, %arg2: memref<1x2048xf32, #tpu.memory_space<vmem>>, %arg3: memref<1x2048xf32, #tpu.memory_space<vmem>>) attributes {dimension_semantics = [#tpu.dimension_semantics<parallel>], iteration_bounds = array<i64: 1>, scalar_prefetch = 0 : i64, scratch_operands = 0 : i64, tpu.core_type = #tpu.core_type<tc>, window_params = [{transform_indices = @transform_0, window_bounds = array<i64: 1, 2048>}, {transform_indices = @transform_1, window_bounds = array<i64: 1, 2048>}, {transform_indices = @transform_2, window_bounds = array<i64: 1, 2048>}]} {
    %c0 = arith.constant 0 : index
    %c0_0 = arith.constant 0 : index
    %0 = vector.load %arg1[%c0, %c0_0] : memref<1x2048xf32, #tpu.memory_space<vmem>>, vector<1x2048xf32>
    %c0_1 = arith.constant 0 : index
    %c0_2 = arith.constant 0 : index
    %1 = vector.load %arg2[%c0_1, %c0_2] : memref<1x2048xf32, #tpu.memory_space<vmem>>, vector<1x2048xf32>
    %2 = arith.mulf %0, %1 : vector<1x2048xf32>
    %c0_3 = arith.constant 0 : index
    %c0_4 = arith.constant 0 : index
    %3 = vector.load %arg3[%c0_3, %c0_4] : memref<1x2048xf32, #tpu.memory_space<vmem>>, vector<1x2048xf32>
    tpu.vector_store %arg3[%c0_3, %c0_4], %2 {strides = array<i32>} : memref<1x2048xf32, #tpu.memory_space<vmem>>, vector<1x2048xf32>,
    return
  }
  func.func @transform_0(%arg0: i32) -> (i32, i32) {
    %c0_i32 = arith.constant 0 : i32
    %c0_i32_0 = arith.constant 0 : i32
    return %arg0, %c0_i32 : i32, i32
  }
  func.func @transform_1(%arg0: i32) -> (i32, i32) {
    %c0_i32 = arith.constant 0 : i32
    %c0_i32_0 = arith.constant 0 : i32
    return %arg0, %c0_i32 : i32, i32
  }
  func.func @transform_2(%arg0: i32) -> (i32, i32) {
    %c0_i32 = arith.constant 0 : i32
    %c0_i32_0 = arith.constant 0 : i32
    return %arg0, %c0_i32 : i32, i32
  }
}

</mosaic_0001>

<llo_original>
// kernel: tpu_custom_call.1
$region0: #{tpu_custom_call.1}
  #allocation0 [shape = 'u32[]', space=smem, size = 0x4, offset = 0x4, fixed_abs, tag = 'smem constant byte address 0x4 - core index']
  #allocation1 [shape = 'u32[144,128]{1,0:T(1,128)}', space=vmem, size = 0x12000, scoped, tag = 'internal scratch']
  %s0 = inlined_call_operand.hbm [shape: f32[1,2048], index: 0, kind: input, shape index: {}]
  %s1 = inlined_call_operand.hbm [shape: f32[1,2048], index: 1, kind: input, shape index: {}]
  %s2 = inlined_call_operand.hbm [shape: f32[1,2048], index: 2, kind: output, shape index: {}]
  %s3 = sld [smem:[#allocation0]]
  $region26: #{tpu_custom_call.1} parent=0
    _
  %s5 = ssub.s32 1, %s3
  %s6 = scalar_select 0, %s5, %s3
  $region1: #{tpu_custom_call.1} parent=0
    #allocation2 [shape = 'u8[8192]{0}', space=vmem, size = 0x2000, scoped, tag = 'input window, operand 0, single buffered']
    #allocation3 [shape = 's32[1]{0}', space=sflag, size = 0x4, scoped, tag = 'scoped memory for tpu_custom_call.1']
    #allocation4 [shape = 's32[1]{0}', space=sflag, size = 0x4, scoped, tag = 'scoped memory for tpu_custom_call.1']
    #allocation5 [shape = 'u8[8192]{0}', space=vmem, size = 0x2000, scoped, tag = 'input window, operand 1, single buffered']
    #allocation6 [shape = 's32[1]{0}', space=sflag, size = 0x4, scoped, tag = 'scoped memory for tpu_custom_call.1']
    #allocation7 [shape = 'u8[8192]{0}', space=vmem, size = 0x2000, scoped, tag = 'output window, operand 0, single buffered']
    %7 = vsyncpa [#allocation3], 0
    %8 = vsyncpa [#allocation6], 0
    %9 = vsyncpa [#allocation4], 0
    // Predicated region
    $region2: #{tpu_custom_call.1} parent=1 // pred_check
      _
    $region3: #{tpu_custom_call.1} parent=1 // pred_check_branch
      %11 = sbr.rel (0) target = $region5
    $region4: #{tpu_custom_call.1} parent=1 // pred_region
      %s13 = ssub.s32 256, 256
      %14 = vsyncadd [#allocation3], %s13
      %s16 = sshll.u32 [#allocation2], 4
      %s17 = int_to_ptr.vmem [resolvable:$true] %s16
      %19 = dma.hbm_to_vmem [thread:$0]  %s0, 256, %s17, [#allocation3]
    $region5: #{tpu_custom_call.1} parent=1 // pred_fallthru
      _
    // Predicated region
    $region6: #{tpu_custom_call.1} parent=1 // pred_check
      _
    $region7: #{tpu_custom_call.1} parent=1 // pred_check_branch
      %21 = sbr.rel (0) target = $region9
    $region8: #{tpu_custom_call.1} parent=1 // pred_region
      %s23 = ssub.s32 256, 256
      %24 = vsyncadd [#allocation6], %s23
      %s26 = sshll.u32 [#allocation5], 4
      %s27 = int_to_ptr.vmem [resolvable:$true] %s26
      %29 = dma.hbm_to_vmem [thread:$0]  %s1, 256, %s27, [#allocation6]
    $region9: #{tpu_custom_call.1} parent=1 // pred_fallthru
      _
    // Predicated region
    $region10: #{tpu_custom_call.1} parent=1 // pred_check
      _
    $region11: #{tpu_custom_call.1} parent=1 // pred_check_branch
      %31 = sbr.rel (0) target = $region13
    $region12: #{tpu_custom_call.1} parent=1 // pred_region
      %32 = dma.done [#allocation3], 256
    $region13: #{tpu_custom_call.1} parent=1 // pred_fallthru
      _
    // Predicated region
    $region14: #{tpu_custom_call.1} parent=1 // pred_check
      _
    $region15: #{tpu_custom_call.1} parent=1 // pred_check_branch
      %34 = sbr.rel (0) target = $region17
    $region16: #{tpu_custom_call.1} parent=1 // pred_region
      %35 = dma.done [#allocation6], 256
    $region17: #{tpu_custom_call.1} parent=1 // pred_fallthru
      _
    %v36 = vld [vmem:[#allocation2] sm:$0xff]
    %v37 = vld [vmem:[#allocation2 + $0x8] sm:$0xff]
    %v38 = vld [vmem:[#allocation5] sm:$0xff]
    %v39 = vld [vmem:[#allocation5 + $0x8] sm:$0xff]
    %v40 = vmul.f32 %v36, %v38
    %v41 = vmul.f32 %v37, %v39
    %42 = vst [vmem:[#allocation7] sm:$0xff] %v40
    %43 = vst [vmem:[#allocation7 + $0x8] sm:$0xff] %v41
    // Predicated region
    $region18: #{tpu_custom_call.1} parent=1 // pred_check
      _
    $region19: #{tpu_custom_call.1} parent=1 // pred_check_branch
      %45 = sbr.rel (0) target = $region21
    $region20: #{tpu_custom_call.1} parent=1 // pred_region
      %s47 = ssub.s32 256, 256
      %48 = vsyncadd [#allocation4], %s47
      %s50 = sshll.u32 [#allocation7], 4
      %s51 = int_to_ptr.vmem [resolvable:$true] %s50
      %53 = dma.vmem_to_hbm [thread:$0]  %s51, 256, %s2, [#allocation4]
    $region21: #{tpu_custom_call.1} parent=1 // pred_fallthru
      _
    // Predicated region
    $region22: #{tpu_custom_call.1} parent=1 // pred_check
      _
    $region23: #{tpu_custom_call.1} parent=1 // pred_check_branch
      %55 = sbr.rel (0) target = $region25
    $region24: #{tpu_custom_call.1} parent=1 // pred_region
      %56 = dma.done [#allocation4], 256
    $region25: #{tpu_custom_call.1} parent=1 // pred_fallthru
      _
    %57 = vsyncpa [#allocation3], 1
    %58 = vsyncpa [#allocation6], 1
    %59 = vsyncpa [#allocation4], 1

</llo_original>
